<compile_context>
chip_gen: v6e
topology: v6e:2x2x1
jax: 0.10.0
libtpu: 0.0.40
codegen_flags: <defaults>
</compile_context>

<pallas_src>
import functools

import jax
import jax.numpy as jnp
from jax.experimental import pallas as pl
from jax.experimental.pallas import tpu as pltpu


# ---------------------------------------------------------------------------
# helpers
# ---------------------------------------------------------------------------
def _round_up(n, m):
    return ((n + m - 1) // m) * m


def _num_tensorcores_per_chip():
    """2 TensorCores only on v7x; v5e/v6e have 1 (megacore split is wasted there)."""
    try:
        kind = jax.devices()[0].device_kind.lower()
    except Exception:
        return 1
    return 2 if "v7" in kind else 1


def _choose_tile(batch, tile_cap, num_tc):
    """Generation-aware batch tile.

    1 TC (v5e/v6e): the fewest grid steps possible -> one big tile.
    2 TC (v7x):     a balanced, even number of tiles so both cores get work,
                    but never more steps than needed to stay under tile_cap.
    """
    tile_cap = max(128, _round_up(tile_cap, 128))
    if num_tc >= 2 and batch > 256:
        n = 2
        tile = _round_up(pl.cdiv(batch, n), 8)
        while tile > tile_cap:
            n += 2
            tile = _round_up(pl.cdiv(batch, n), 8)
        return tile
    if batch <= tile_cap:
        return batch          # single block == full array dim (no padding, no masking)
    return tile_cap           # ragged tail handled by Pallas boundary masking


# ---------------------------------------------------------------------------
# Kernel: fused Linear+ReLU -> Linear+ReLU -> (BN folded) heads + Sigmoid
# ---------------------------------------------------------------------------
def _nn_forward_kernel(x_ref, w1_ref, w2_ref, wht_ref, b12_ref, bh_ref, out_ref,
                       *, compute_dtype):
    h1_dim = w1_ref.shape[1]
    h2_dim = w2_ref.shape[1]

    # in-kernel cast of x to the matmul dtype (reads f32 from HBM only once)
    x = x_ref[...].astype(compute_dtype)

    # shared layer 0: Linear (+ Dropout identity at eval) + ReLU
    h1 = jnp.dot(x, w1_ref[...], preferred_element_type=jnp.float32)
    h1 = jnp.maximum(h1 + b12_ref[0:1, :h1_dim], 0.0)

    # shared layer 1: Linear (+ Dropout identity at eval) + ReLU
    h2 = jnp.dot(h1.astype(compute_dtype), w2_ref[...],
                 preferred_element_type=jnp.float32)
    h2 = jnp.maximum(h2 + b12_ref[1:2, :h2_dim], 0.0)

    # BatchNorm1d (running stats) is folded into wht/bh on the host.
    # Task heads: logits[b, t] = sum_k h2[b, k] * wht[t, k]   -> (tile, T)
    logits = jax.lax.dot_general(
        h2.astype(wht_ref.dtype), wht_ref[...],
        dimension_numbers=(((1,), (1,)), ((), ())),
        preferred_element_type=jnp.float32)
    out_ref[...] = jax.nn.sigmoid(logits + bh_ref[...]).astype(out_ref.dtype)


# ---------------------------------------------------------------------------
# Wrapper
# ---------------------------------------------------------------------------
def neural_network_forward(x, params, *, eps=1e-5, tile_b=4096, use_bf16=True,
                           out_dtype=None, num_tc=None):
    """x: (B, feature_num). Returns (B, task_number), matching the PyTorch module."""
    B, F = x.shape
    f32 = jnp.float32

    w1 = params["w1"].astype(f32)                 # (F, H1)
    b1 = params["b1"].reshape(-1).astype(f32)     # (H1,)
    w2 = params["w2"].astype(f32)                 # (H1, H2)
    b2 = params["b2"].reshape(-1).astype(f32)     # (H2,)
    wh_t = params["wh_t"].astype(f32)             # (T, H2)  -- stacked task heads
    bh = params["bh"].reshape(-1).astype(f32)     # (T,)
    gamma = params["gamma"].reshape(-1).astype(f32)
    beta = params["beta"].reshape(-1).astype(f32)
    mean = params["mean"].reshape(-1).astype(f32)
    var = params["var"].reshape(-1).astype(f32)

    H1, H2, T = w1.shape[1], w2.shape[1], wh_t.shape[0]

    # ---- Fold BatchNorm1d (eval-mode running stats) into the head linear ----
    a = gamma * jax.lax.rsqrt(var + eps)          # (H2,)
    c = beta - mean * a                           # (H2,)
    wh_t_f = wh_t * a[None, :]                    # (T, H2)
    bh_row = (bh + wh_t @ c).reshape(1, T)        # (1, T) -- broadcast over rows

    # ---- Pack the two remaining per-feature bias vectors into one array ----
    HP = _round_up(max(H1, H2), 128)
    b12 = jnp.zeros((2, HP), f32).at[0, :H1].set(b1).at[1, :H2].set(b2)

    # ---- weights in matmul dtype (tiny, cast once); x stays f32 in HBM ----
    cdt = jnp.bfloat16 if use_bf16 else f32
    w1m, w2m, whm = w1.astype(cdt), w2.astype(cdt), wh_t_f.astype(cdt)

    # ---- generation-aware batch tiling; ragged tail via boundary masking ----
    if num_tc is None:
        num_tc = _num_tensorcores_per_chip()
    tile = _choose_tile(B, tile_b, num_tc)
    grid = (pl.cdiv(B, tile),)
    out_dtype = x.dtype if out_dtype is None else out_dtype

    def const(shape):
        return pl.BlockSpec(shape, lambda i: (0,) * len(shape))

    out = pl.pallas_call(
        functools.partial(_nn_forward_kernel, compute_dtype=cdt),
        out_shape=jax.ShapeDtypeStruct((B, T), out_dtype),
        grid_spec=pltpu.PrefetchScalarGridSpec(
            num_scalar_prefetch=0,
            grid=grid,
            in_specs=[
                pl.BlockSpec((tile, F), lambda i: (i, 0)),   # x, tiled over batch
                const((F, H1)),                              # w1
                const((H1, H2)),                             # w2
                const((T, H2)),                              # head weights (BN folded)
                const((2, HP)),                              # packed b1/b2
                const((1, T)),                               # head bias (BN folded)
            ],
            out_specs=pl.BlockSpec((tile, T), lambda i: (i, 0)),
        ),
        compiler_params=pltpu.CompilerParams(
            dimension_semantics=("parallel",),
            vmem_limit_bytes=32 * 1024 * 1024),
    )(x, w1m, w2m, whm, b12, bh_row)

    return out


# ---------------------------------------------------------------------------
# Pure-JAX reference (exact module semantics, highest-precision matmuls)
# ---------------------------------------------------------------------------
def _reference(x, p, eps):
    hp = jax.lax.Precision.HIGHEST
    h = jnp.maximum(jnp.dot(x, p["w1"], precision=hp) + p["b1"], 0.0)
    h = jnp.maximum(jnp.dot(h, p["w2"], precision=hp) + p["b2"], 0.0)
    h = (h - p["mean"]) * jax.lax.rsqrt(p["var"] + eps) * p["gamma"] + p["beta"]
    return jax.nn.sigmoid(jnp.dot(h, p["wh_t"].T, precision=hp) + p["bh"])


if __name__ == "__main__":
    # Config implied by the module: feature_num=32, hidden_units=[64, 32],
    # task_number=8, activations=['relu','relu','sigmoid'], Dropout (identity
    # at eval), BatchNorm1d(eps=1e-5) after the last shared layer.
    B, F, H1, H2, T = 16, 32, 64, 32, 8
    eps = 1e-5

    key = jax.random.PRNGKey(0)
    ks = jax.random.split(key, 13)

    def init_linear(kw, kb, fan_in, shape_w, shape_b):
        bound = fan_in ** -0.5
        w = jax.random.uniform(kw, shape_w, jnp.float32, -bound, bound)
        b = jax.random.uniform(kb, shape_b, jnp.float32, -bound, bound)
        return w, b

    w1, b1 = init_linear(ks[0], ks[1], F, (F, H1), (H1,))
    w2, b2 = init_linear(ks[2], ks[3], H1, (H1, H2), (H2,))
    # T task heads Linear(H2, 1) stacked -> (T, H2)
    wh_t, bh = init_linear(ks[4], ks[5], H2, (T, H2), (T,))

    params = {
        "w1": w1, "b1": b1, "w2": w2, "b2": b2,
        "wh_t": wh_t, "bh": bh,
        # non-trivial running stats to exercise the BN fold
        "gamma": jax.random.uniform(ks[6], (H2,), jnp.float32, 0.5, 1.5),
        "beta": 0.1 * jax.random.normal(ks[7], (H2,), jnp.float32),
        "mean": 0.1 * jax.random.normal(ks[8], (H2,), jnp.float32),
        "var": jax.random.uniform(ks[9], (H2,), jnp.float32, 0.5, 1.5),
    }
    # TODO(synk): training-mode Dropout masks and BatchNorm running-stat updates
    # are not implemented (forward pass uses eval-mode semantics).

    x = jax.random.normal(ks[10], (B, F), jnp.float32)
    ref = _reference(x, params, eps)

    # exact-semantics check (f32 matmul path)
    out_f32 = jax.block_until_ready(
        neural_network_forward(x, params, eps=eps, use_bf16=False))
    assert out_f32.shape == (B, T), out_f32.shape
    assert jnp.allclose(out_f32, ref, atol=1e-4, rtol=1e-4)

    # default fast path (bf16 matmul operands, f32 accumulation)
    out = jax.block_until_ready(neural_network_forward(x, params, eps=eps))
    assert out.shape == (B, T), out.shape
    assert jnp.allclose(out, ref, atol=2e-2)

    # batch that is not 8/128-aligned (single big tile on 1-TC, even split on v7x)
    B2 = 300
    x2 = jax.random.normal(ks[11], (B2, F), jnp.float32)
    out2 = jax.block_until_ready(neural_network_forward(x2, params, eps=eps))
    ref2 = _reference(x2, params, eps)
    assert out2.shape == (B2, T), out2.shape
    assert jnp.allclose(out2, ref2, atol=2e-2)

    # force a multi-step grid with a ragged last block (boundary masking path)
    B3 = 1000
    x3 = jax.random.normal(ks[12], (B3, F), jnp.float32)
    out3 = jax.block_until_ready(
        neural_network_forward(x3, params, eps=eps, tile_b=256))
    ref3 = _reference(x3, params, eps)
    assert out3.shape == (B3, T), out3.shape
    assert jnp.allclose(out3, ref3, atol=2e-2)

    print("KERNEL_OK")
</pallas_src>

<mosaic_0001>
module attributes {stable_mosaic.version = 11 : i64} {
  func.func @_nn_forward_kernel(%arg0: i32, %arg1: memref<16x32xf32, #tpu.memory_space<vmem>>, %arg2: memref<32x64xf32, #tpu.memory_space<vmem>>, %arg3: memref<64x32xf32, #tpu.memory_space<vmem>>, %arg4: memref<8x32xf32, #tpu.memory_space<vmem>>, %arg5: memref<2x128xf32, #tpu.memory_space<vmem>>, %arg6: memref<1x8xf32, #tpu.memory_space<vmem>>, %arg7: memref<16x8xf32, #tpu.memory_space<vmem>>) attributes {dimension_semantics = [#tpu.dimension_semantics<parallel>], iteration_bounds = array<i64: 1>, scalar_prefetch = 0 : i64, scratch_operands = 0 : i64, tpu.core_type = #tpu.core_type<tc>, window_params = [{transform_indices = @transform_0, window_bounds = array<i64: 16, 32>}, {pipeline_mode = #tpu.pipeline_mode<synchronous>, transform_indices = @transform_1, window_bounds = array<i64: 32, 64>}, {pipeline_mode = #tpu.pipeline_mode<synchronous>, transform_indices = @transform_2, window_bounds = array<i64: 64, 32>}, {pipeline_mode = #tpu.pipeline_mode<synchronous>, transform_indices = @transform_3, window_bounds = array<i64: 8, 32>}, {pipeline_mode = #tpu.pipeline_mode<synchronous>, transform_indices = @transform_4, window_bounds = array<i64: 2, 128>}, {pipeline_mode = #tpu.pipeline_mode<synchronous>, transform_indices = @transform_5, window_bounds = array<i64: 1, 8>}, {transform_indices = @transform_6, window_bounds = array<i64: 16, 8>}]} {
    %c0 = arith.constant 0 : index
    %c0_0 = arith.constant 0 : index
    %0 = vector.load %arg1[%c0, %c0_0] : memref<16x32xf32, #tpu.memory_space<vmem>>, vector<16x32xf32>
    %c0_1 = arith.constant 0 : index
    %c0_2 = arith.constant 0 : index
    %1 = vector.load %arg2[%c0_1, %c0_2] : memref<32x64xf32, #tpu.memory_space<vmem>>, vector<32x64xf32>
    %cst = arith.constant dense<0.000000e+00> : vector<16x64xf32>
    %2 = tpu.matmul %0, %1, %cst {dimension_numbers = #tpu.dot_dimension_numbers<[1], [0], [0], [1], [0, 0, 1, 1], [], []>} : vector<16x32xf32>, vector<32x64xf32>, vector<16x64xf32> -> vector<16x64xf32>
    %c0_3 = arith.constant 0 : index
    %c0_4 = arith.constant 0 : index
    %3 = vector.load %arg5[%c0_3, %c0_4] : memref<2x128xf32, #tpu.memory_space<vmem>>, vector<1x64xf32>
    %4 = vector.broadcast %3 : vector<1x64xf32> to vector<16x64xf32>
    %5 = arith.addf %2, %4 : vector<16x64xf32>
    %cst_5 = arith.constant 0.000000e+00 : f32
    %6 = vector.broadcast %cst_5 : f32 to vector<16x64xf32>
    %7 = arith.maximumf %5, %6 : vector<16x64xf32>
    %c0_6 = arith.constant 0 : index
    %c0_7 = arith.constant 0 : index
    %8 = vector.load %arg3[%c0_6, %c0_7] : memref<64x32xf32, #tpu.memory_space<vmem>>, vector<64x32xf32>
    %cst_8 = arith.constant dense<0.000000e+00> : vector<16x32xf32>
    %9 = tpu.matmul %7, %8, %cst_8 {dimension_numbers = #tpu.dot_dimension_numbers<[1], [0], [0], [1], [0, 0, 1, 1], [], []>} : vector<16x64xf32>, vector<64x32xf32>, vector<16x32xf32> -> vector<16x32xf32>
    %c1 = arith.constant 1 : index
    %c0_9 = arith.constant 0 : index
    %10 = vector.load %arg5[%c1, %c0_9] : memref<2x128xf32, #tpu.memory_space<vmem>>, vector<1x32xf32>
    %11 = vector.broadcast %10 : vector<1x32xf32> to vector<16x32xf32>
    %12 = arith.addf %9, %11 : vector<16x32xf32>
    %cst_10 = arith.constant 0.000000e+00 : f32
    %13 = vector.broadcast %cst_10 : f32 to vector<16x32xf32>
    %14 = arith.maximumf %12, %13 : vector<16x32xf32>
    %c0_11 = arith.constant 0 : index
    %c0_12 = arith.constant 0 : index
    %15 = vector.load %arg4[%c0_11, %c0_12] : memref<8x32xf32, #tpu.memory_space<vmem>>, vector<8x32xf32>
    %cst_13 = arith.constant dense<0.000000e+00> : vector<16x8xf32>
    %16 = tpu.matmul %14, %15, %cst_13 {dimension_numbers = #tpu.dot_dimension_numbers<[1], [1], [0], [0], [0, 0, 1, 0], [], []>} : vector<16x32xf32>, vector<8x32xf32>, vector<16x8xf32> -> vector<16x8xf32>
    %c0_14 = arith.constant 0 : index
    %c0_15 = arith.constant 0 : index
    %17 = vector.load %arg6[%c0_14, %c0_15] : memref<1x8xf32, #tpu.memory_space<vmem>>, vector<1x8xf32>
    %18 = vector.broadcast %17 : vector<1x8xf32> to vector<16x8xf32>
    %19 = arith.addf %16, %18 : vector<16x8xf32>
    %20 = arith.negf %19 : vector<16x8xf32>
    %21 = math.exp %20 : vector<16x8xf32>
    %cst_16 = arith.constant 1.000000e+00 : f32
    %22 = vector.broadcast %cst_16 : f32 to vector<16x8xf32>
    %23 = arith.addf %22, %21 : vector<16x8xf32>
    %24 = arith.divf %22, %23 : vector<16x8xf32>
    %c0_17 = arith.constant 0 : index
    %c0_18 = arith.constant 0 : index
    %25 = vector.load %arg7[%c0_17, %c0_18] : memref<16x8xf32, #tpu.memory_space<vmem>>, vector<16x8xf32>
    tpu.vector_store %arg7[%c0_17, %c0_18], %24 {strides = array<i32>} : memref<16x8xf32, #tpu.memory_space<vmem>>, vector<16x8xf32>,
    return
  }
  func.func @transform_0(%arg0: i32) -> (i32, i32) {
    %c0_i32 = arith.constant 0 : i32
    %c0_i32_0 = arith.constant 0 : i32
    return %arg0, %c0_i32 : i32, i32
  }
  func.func @transform_1(%arg0: i32) -> (i32, i32) {
    %c0_i32 = arith.constant 0 : i32
    %c0_i32_0 = arith.constant 0 : i32
    %c0_i32_1 = arith.constant 0 : i32
    return %c0_i32, %c0_i32_0 : i32, i32
  }
  func.func @transform_2(%arg0: i32) -> (i32, i32) {
    %c0_i32 = arith.constant 0 : i32
    %c0_i32_0 = arith.constant 0 : i32
    %c0_i32_1 = arith.constant 0 : i32
    return %c0_i32, %c0_i32_0 : i32, i32
  }
  func.func @transform_3(%arg0: i32) -> (i32, i32) {
    %c0_i32 = arith.constant 0 : i32
    %c0_i32_0 = arith.constant 0 : i32
    %c0_i32_1 = arith.constant 0 : i32
    return %c0_i32, %c0_i32_0 : i32, i32
  }
  func.func @transform_4(%arg0: i32) -> (i32, i32) {
    %c0_i32 = arith.constant 0 : i32
    %c0_i32_0 = arith.constant 0 : i32
    %c0_i32_1 = arith.constant 0 : i32
    return %c0_i32, %c0_i32_0 : i32, i32
  }
  func.func @transform_5(%arg0: i32) -> (i32, i32) {
    %c0_i32 = arith.constant 0 : i32
    %c0_i32_0 = arith.constant 0 : i32
    %c0_i32_1 = arith.constant 0 : i32
    return %c0_i32, %c0_i32_0 : i32, i32
  }
  func.func @transform_6(%arg0: i32) -> (i32, i32) {
    %c0_i32 = arith.constant 0 : i32
    %c0_i32_0 = arith.constant 0 : i32
    return %arg0, %c0_i32 : i32, i32
  }
}

</mosaic_0001>

<llo_original>
// kernel: tpu_custom_call.1
$region0: #{tpu_custom_call.1}
  #allocation0 [shape = 'u32[]', space=smem, size = 0x4, offset = 0x4, fixed_abs, tag = 'smem constant byte address 0x4 - core index']
  #allocation1 [shape = 'u32[144,128]{1,0:T(1,128)}', space=vmem, size = 0x12000, scoped, tag = 'internal scratch']
  %s0 = inlined_call_operand.vmem [shape: f32[16,32], index: 0, kind: input, shape index: {}]
  %s1 = inlined_call_operand.vmem [shape: f32[32,64], index: 1, kind: input, shape index: {}]
  %s2 = inlined_call_operand.vmem [shape: f32[64,32], index: 2, kind: input, shape index: {}]
  %s3 = inlined_call_operand.vmem [shape: f32[8,32], index: 3, kind: input, shape index: {}]
  %s4 = inlined_call_operand.vmem [shape: f32[2,128], index: 4, kind: input, shape index: {}]
  %s5 = inlined_call_operand.vmem [shape: f32[1,8], index: 5, kind: input, shape index: {}]
  %s6 = inlined_call_operand.vmem [shape: f32[16,8], index: 6, kind: output, shape index: {}]
  %s7 = sld [smem:[#allocation0]]
  $region34: #{tpu_custom_call.1} parent=0
    _
  %s9 = ssub.s32 1, %s7
  %s10 = scalar_select 0, %s9, %s7
  // Predicated region
  $region2: #{tpu_custom_call.1} parent=0 // pred_check
    _
  $region3: #{tpu_custom_call.1} parent=0 // pred_check_branch
    %12 = sbr.rel (0) target = $region5
  $region4: #{tpu_custom_call.1} parent=0 // pred_region
    _
  $region5: #{tpu_custom_call.1} parent=0 // pred_fallthru
    _
  // Predicated region
  $region6: #{tpu_custom_call.1} parent=0 // pred_check
    _
  $region7: #{tpu_custom_call.1} parent=0 // pred_check_branch
    %14 = sbr.rel (0) target = $region9
  $region8: #{tpu_custom_call.1} parent=0 // pred_region
    _
  $region9: #{tpu_custom_call.1} parent=0 // pred_fallthru
    _
  // Predicated region
  $region10: #{tpu_custom_call.1} parent=0 // pred_check
    _
  $region11: #{tpu_custom_call.1} parent=0 // pred_check_branch
    %16 = sbr.rel (0) target = $region13
  $region12: #{tpu_custom_call.1} parent=0 // pred_region
    _
  $region13: #{tpu_custom_call.1} parent=0 // pred_fallthru
    _
  // Predicated region
  $region14: #{tpu_custom_call.1} parent=0 // pred_check
    _
  $region15: #{tpu_custom_call.1} parent=0 // pred_check_branch
    %18 = sbr.rel (0) target = $region17
  $region16: #{tpu_custom_call.1} parent=0 // pred_region
    _
  $region17: #{tpu_custom_call.1} parent=0 // pred_fallthru
    _
  // Predicated region
  $region18: #{tpu_custom_call.1} parent=0 // pred_check
    _
  $region19: #{tpu_custom_call.1} parent=0 // pred_check_branch
    %20 = sbr.rel (0) target = $region21
  $region20: #{tpu_custom_call.1} parent=0 // pred_region
    _
  $region21: #{tpu_custom_call.1} parent=0 // pred_fallthru
    _
  // Predicated region
  $region22: #{tpu_custom_call.1} parent=0 // pred_check
    _
  $region23: #{tpu_custom_call.1} parent=0 // pred_check_branch
    %22 = sbr.rel (0) target = $region25
  $region24: #{tpu_custom_call.1} parent=0 // pred_region
    _
  $region25: #{tpu_custom_call.1} parent=0 // pred_fallthru
    _
  %v23 = vld [vmem:[%s0] sm:$0xff]
  %v24 = vld [vmem:[%s0 + $0x8] sm:$0xff]
  %v25 = vld [vmem:[%s1] sm:$0xff]
  %v26 = vld [vmem:[%s1 + $0x8] sm:$0xff]
  %v27 = vld [vmem:[%s1 + $0x10] sm:$0xff]
  %v28 = vld [vmem:[%s1 + $0x18] sm:$0xff]
  %v29 = vld [vmem:[%s4] sm:$0x1]
  %v30 = vlaneseq
  %v31 = vshrl.u32 %v30, 7
  %v32 = vsub.s32 0, %v31
  %v33 = vrot.slane %v29, %v32
  %vm34 = vcmask 261120
  %v36 = vsel %vm34, %v23, 0
  %v39 = vsel %vm34, %v24, 0
  %41 = vmatprep.subr.mxu0 0.0
  %42 = vmatpush1.msra.mxu0 0.0
  %43 = vmatprep.subr.mxu0 0.0
  %44 = vmatpush1.msra.mxu0 0.0
  %45 = vmatprep.subr.mxu0 0.0
  %46 = vmatpush1.msra.mxu0 0.0
  %47 = vmatprep.subr.mxu0 0.0
  %48 = vmatpush1.msra.mxu0 0.0
  %49 = vmatprep.subr.mxu0 0.0
  %50 = vmatpush1.msra.mxu0 0.0
  %51 = vmatprep.subr.mxu0 0.0
  %52 = vmatpush1.msra.mxu0 0.0
  %53 = vmatprep.subr.mxu0 0.0
  %54 = vmatpush1.msra.mxu0 0.0
  %55 = vmatprep.subr.mxu0 0.0
  %56 = vmatpush1.msra.mxu0 0.0
  %57 = vmatprep.subr.mxu0 0.0
  %58 = vmatpush1.msra.mxu0 0.0
  %59 = vmatprep.subr.mxu0 0.0
  %60 = vmatpush1.msra.mxu0 0.0
  %61 = vmatprep.subr.mxu0 0.0
  %62 = vmatpush1.msra.mxu0 0.0
  %63 = vmatprep.subr.mxu0 0.0
  %64 = vmatpush1.msra.mxu0 0.0
  %65 = vmatprep.subr.mxu0 0.0
  %66 = vmatpush1.msra.mxu0 %v28
  %67 = vmatprep.subr.mxu0 0.0
  %68 = vmatpush1.msra.mxu0 %v27
  %69 = vmatprep.subr.mxu0 0.0
  %70 = vmatpush1.msra.mxu0 %v26
  %71 = vmatprep.subr.mxu0 0.0
  %72 = vmatpush1.msra.mxu0 %v25
  %73 = vmatprep.subr.mxu0 0.0
  %74 = vmatpush2.msra.mxu0 0.0
  %75 = vmatprep.subr.mxu0 0.0
  %76 = vmatpush2.msra.mxu0 0.0
  %77 = vmatprep.subr.mxu0 0.0
  %78 = vmatpush2.msra.mxu0 0.0
  %79 = vmatprep.subr.mxu0 0.0
  %80 = vmatpush2.msra.mxu0 0.0
  %81 = vmatprep.subr.mxu0 0.0
  %82 = vmatpush2.msra.mxu0 0.0
  %83 = vmatprep.subr.mxu0 0.0
  %84 = vmatpush2.msra.mxu0 0.0
  %85 = vmatprep.subr.mxu0 0.0
  %86 = vmatpush2.msra.mxu0 0.0
  %87 = vmatprep.subr.mxu0 0.0
  %88 = vmatpush2.msra.mxu0 0.0
  %89 = vmatprep.subr.mxu0 0.0
  %90 = vmatpush2.msra.mxu0 0.0
  %91 = vmatprep.subr.mxu0 0.0
  %92 = vmatpush2.msra.mxu0 0.0
  %93 = vmatprep.subr.mxu0 0.0
  %94 = vmatpush2.msra.mxu0 0.0
  %95 = vmatprep.subr.mxu0 0.0
  %96 = vmatpush2.msra.mxu0 0.0
  %97 = vmatprep.subr.mxu0 0.0
  %98 = vmatpush2.msra.mxu0 0.0
  %99 = vmatprep.subr.mxu0 0.0
  %100 = vmatpush2.msra.mxu0 0.0
  %101 = vmatprep.subr.mxu0 0.0
  %102 = vmatpush2.msra.mxu0 0.0
  %103 = vmatprep.subr.mxu0 0.0
  %104 = vmatpush2.msra.mxu0 0.0
  %105 = vmatprep.mubr.f32.mxu0 0.0
  %106 = vmatmul.mubr.f32.gmra.mxu0 %v36
  %v107 = vpop.f32.mrf.mxu0
  %v108 = vadd.f32 %v33, %v107
  %v109 = vpop.f32.mrf.mxu0
  %110 = vmatprep.mubr.f32.mxu0 0.0
  %111 = vmatmul.mubr.f32.gmra.mxu0 %v39
  %v112 = vpop.f32.mrf.mxu0
  %v113 = vadd.f32 %v33, %v112
  %v114 = vpop.f32.mrf.mxu0
  %115 = vdwg.mxu0
  %v116 = vmax.f32 %v108, 0.0
  %v117 = vmax.f32 %v113, 0.0
  %v118 = vld [vmem:[%s2] sm:$0xff]
  %v119 = vld [vmem:[%s2 + $0x8] sm:$0xff]
  %v120 = vld [vmem:[%s2 + $0x10] sm:$0xff]
  %v121 = vld [vmem:[%s2 + $0x18] sm:$0xff]
  %v122 = vld [vmem:[%s2 + $0x20] sm:$0xff]
  %v123 = vld [vmem:[%s2 + $0x28] sm:$0xff]
  %v124 = vld [vmem:[%s2 + $0x30] sm:$0xff]
  %v125 = vld [vmem:[%s2 + $0x38] sm:$0xff]
  %v126 = vld [vmem:[%s4 + $0x1] sm:$0x1]
  %v127 = vlaneseq
  %v128 = vshrl.u32 %v127, 7
  %v129 = vsub.s32 0, %v128
  %v130 = vrot.slane %v126, %v129
  %vm131 = vcmask 523264
  %v133 = vsel %vm131, %v116, 0
  %v136 = vsel %vm131, %v117, 0
  %138 = vmatprep.subr.mxu0 0.0
  %139 = vmatpush1.msra.mxu0 0.0
  %140 = vmatprep.subr.mxu0 0.0
  %141 = vmatpush1.msra.mxu0 0.0
  %142 = vmatprep.subr.mxu0 0.0
  %143 = vmatpush1.msra.mxu0 0.0
  %144 = vmatprep.subr.mxu0 0.0
  %145 = vmatpush1.msra.mxu0 0.0
  %146 = vmatprep.subr.mxu0 0.0
  %147 = vmatpush1.msra.mxu0 0.0
  %148 = vmatprep.subr.mxu0 0.0
  %149 = vmatpush1.msra.mxu0 0.0
  %150 = vmatprep.subr.mxu0 0.0
  %151 = vmatpush1.msra.mxu0 0.0
  %152 = vmatprep.subr.mxu0 0.0
  %153 = vmatpush1.msra.mxu0 0.0
  %154 = vmatprep.subr.mxu0 0.0
  %155 = vmatpush1.msra.mxu0 %v125
  %156 = vmatprep.subr.mxu0 0.0
  %157 = vmatpush1.msra.mxu0 %v124
  %158 = vmatprep.subr.mxu0 0.0
  %159 = vmatpush1.msra.mxu0 %v123
  %160 = vmatprep.subr.mxu0 0.0
  %161 = vmatpush1.msra.mxu0 %v122
  %162 = vmatprep.subr.mxu0 0.0
  %163 = vmatpush1.msra.mxu0 %v121
  %164 = vmatprep.subr.mxu0 0.0
  %165 = vmatpush1.msra.mxu0 %v120
  %166 = vmatprep.subr.mxu0 0.0
  %167 = vmatpush1.msra.mxu0 %v119
  %168 = vmatprep.subr.mxu0 0.0
  %169 = vmatpush1.msra.mxu0 %v118
  %170 = vmatprep.subr.mxu0 0.0
  %171 = vmatpush2.msra.mxu0 0.0
  %172 = vmatprep.subr.mxu0 0.0
  %173 = vmatpush2.msra.mxu0 0.0
  %174 = vmatprep.subr.mxu0 0.0
  %175 = vmatpush2.msra.mxu0 0.0
  %176 = vmatprep.subr.mxu0 0.0
  %177 = vmatpush2.msra.mxu0 0.0
  %178 = vmatprep.subr.mxu0 0.0
  %179 = vmatpush2.msra.mxu0 0.0
  %180 = vmatprep.subr.mxu0 0.0
  %181 = vmatpush2.msra.mxu0 0.0
  %182 = vmatprep.subr.mxu0 0.0
  %183 = vmatpush2.msra.mxu0 0.0
  %184 = vmatprep.subr.mxu0 0.0
  %185 = vmatpush2.msra.mxu0 0.0
  %186 = vmatprep.subr.mxu0 0.0
  %187 = vmatpush2.msra.mxu0 0.0
  %188 = vmatprep.subr.mxu0 0.0
  %189 = vmatpush2.msra.mxu0 0.0
  %190 = vmatprep.subr.mxu0 0.0
  %191 = vmatpush2.msra.mxu0 0.0
  %192 = vmatprep.subr.mxu0 0.0
  %193 = vmatpush2.msra.mxu0 0.0
  %194 = vmatprep.subr.mxu0 0.0
  %195 = vmatpush2.msra.mxu0 0.0
  %196 = vmatprep.subr.mxu0 0.0
  %197 = vmatpush2.msra.mxu0 0.0
  %198 = vmatprep.subr.mxu0 0.0
  %199 = vmatpush2.msra.mxu0 0.0
  %200 = vmatprep.subr.mxu0 0.0
  %201 = vmatpush2.msra.mxu0 0.0
  %202 = vmatprep.mubr.f32.mxu0 0.0
  %203 = vmatmul.mubr.f32.gmra.mxu0 %v133
  %v204 = vpop.f32.mrf.mxu0
  %v205 = vadd.f32 %v130, %v204
  %v206 = vpop.f32.mrf.mxu0
  %207 = vmatprep.mubr.f32.mxu0 0.0
  %208 = vmatmul.mubr.f32.gmra.mxu0 %v136
  %v209 = vpop.f32.mrf.mxu0
  %v210 = vadd.f32 %v130, %v209
  %v211 = vpop.f32.mrf.mxu0
  %212 = vdwg.mxu0
  %v213 = vmax.f32 %v205, 0.0
  %v214 = vmax.f32 %v210, 0.0
  %v215 = vld [vmem:[%s3] sm:$0xff]
  %v216 = vld [vmem:[%s5] sm:$0x1]
  %v218 = vlaneseq
  %v219 = vshrl.u32 %v218, 7
  %v220 = vsub.s32 0, %v219
  %v221 = vrot.slane %v216, %v220
  %v224 = vsel %vm34, %v213, 0
  %v227 = vsel %vm34, %v214, 0
  %v230 = vsel %vm34, %v215, 0
  %232 = vmatprep.subr.mxu0 0.0
  %233 = vmatpush1.xpose.msra.mxu0 0.0
  %234 = vmatprep.subr.mxu0 0.0
  %235 = vmatpush1.xpose.msra.mxu0 0.0
  %236 = vmatprep.subr.mxu0 0.0
  %237 = vmatpush1.xpose.msra.mxu0 0.0
  %238 = vmatprep.subr.mxu0 0.0
  %239 = vmatpush1.xpose.msra.mxu0 0.0
  %240 = vmatprep.subr.mxu0 0.0
  %241 = vmatpush1.xpose.msra.mxu0 0.0
  %242 = vmatprep.subr.mxu0 0.0
  %243 = vmatpush1.xpose.msra.mxu0 0.0
  %244 = vmatprep.subr.mxu0 0.0
  %245 = vmatpush1.xpose.msra.mxu0 0.0
  %246 = vmatprep.subr.mxu0 0.0
  %247 = vmatpush1.xpose.msra.mxu0 0.0
  %248 = vmatprep.subr.mxu0 0.0
  %249 = vmatpush1.xpose.msra.mxu0 0.0
  %250 = vmatprep.subr.mxu0 0.0
  %251 = vmatpush1.xpose.msra.mxu0 0.0
  %252 = vmatprep.subr.mxu0 0.0
  %253 = vmatpush1.xpose.msra.mxu0 0.0
  %254 = vmatprep.subr.mxu0 0.0
  %255 = vmatpush1.xpose.msra.mxu0 0.0
  %256 = vmatprep.subr.mxu0 0.0
  %257 = vmatpush1.xpose.msra.mxu0 0.0
  %258 = vmatprep.subr.mxu0 0.0
  %259 = vmatpush1.xpose.msra.mxu0 0.0
  %260 = vmatprep.subr.mxu0 0.0
  %261 = vmatpush1.xpose.msra.mxu0 0.0
  %262 = vmatprep.subr.mxu0 0.0
  %263 = vmatpush1.xpose.msra.mxu0 %v230
  %264 = vmatprep.subr.mxu0 0.0
  %265 = vmatpush2.xpose.msra.mxu0 0.0
  %266 = vmatprep.subr.mxu0 0.0
  %267 = vmatpush2.xpose.msra.mxu0 0.0
  %268 = vmatprep.subr.mxu0 0.0
  %269 = vmatpush2.xpose.msra.mxu0 0.0
  %270 = vmatprep.subr.mxu0 0.0
  %271 = vmatpush2.xpose.msra.mxu0 0.0
  %272 = vmatprep.subr.mxu0 0.0
  %273 = vmatpush2.xpose.msra.mxu0 0.0
  %274 = vmatprep.subr.mxu0 0.0
  %275 = vmatpush2.xpose.msra.mxu0 0.0
  %276 = vmatprep.subr.mxu0 0.0
  %277 = vmatpush2.xpose.msra.mxu0 0.0
  %278 = vmatprep.subr.mxu0 0.0
  %279 = vmatpush2.xpose.msra.mxu0 0.0
  %280 = vmatprep.subr.mxu0 0.0
  %281 = vmatpush2.xpose.msra.mxu0 0.0
  %282 = vmatprep.subr.mxu0 0.0
  %283 = vmatpush2.xpose.msra.mxu0 0.0
  %284 = vmatprep.subr.mxu0 0.0
  %285 = vmatpush2.xpose.msra.mxu0 0.0
  %286 = vmatprep.subr.mxu0 0.0
  %287 = vmatpush2.xpose.msra.mxu0 0.0
  %288 = vmatprep.subr.mxu0 0.0
  %289 = vmatpush2.xpose.msra.mxu0 0.0
  %290 = vmatprep.subr.mxu0 0.0
  %291 = vmatpush2.xpose.msra.mxu0 0.0
  %292 = vmatprep.subr.mxu0 0.0
  %293 = vmatpush2.xpose.msra.mxu0 0.0
  %294 = vmatprep.subr.mxu0 0.0
  %295 = vmatpush2.xpose.msra.mxu0 0.0
  %296 = vmatprep.mubr.f32.mxu0 0.0
  %297 = vmatmul.mubr.f32.gmra.mxu0 %v224
  %v298 = vpop.f32.mrf.mxu0
  %v299 = vadd.f32 %v221, %v298
  %v300 = vpop.f32.mrf.mxu0
  %301 = vmatprep.mubr.f32.mxu0 0.0
  %302 = vmatmul.mubr.f32.gmra.mxu0 %v227
  %v303 = vpop.f32.mrf.mxu0
  %v304 = vadd.f32 %v221, %v303
  %v305 = vpop.f32.mrf.mxu0
  %306 = vdwg.mxu0
  %v307 = vxor.u32 %v299, 2147483648
  %v308 = vxor.u32 %v304, 2147483648
  %v309 = vmul.f32 %v307, 1.442695
  %v310 = vpow.pop %v309
  %v311 = vmul.f32 %v308, 1.442695
  %v312 = vpow.pop %v311
  %v313 = vadd.f32 %v310, 1.0
  %v314 = vadd.f32 %v312, 1.0
  %v315 = vrcp.pop %v313
  %v316 = vmul.f32 1.0, %v315
  %v317 = vrcp.pop %v314
  %v318 = vmul.f32 1.0, %v317
  %vm319 = vcmask 64512
  %320 = vst.msk [vmem:[%s6] sm:$0xff] %vm319, %v316
  %321 = vst.msk [vmem:[%s6 + $0x8] sm:$0xff] %vm319, %v318
  // Predicated region
  $region26: #{tpu_custom_call.1} parent=0 // pred_check
    _
  $region27: #{tpu_custom_call.1} parent=0 // pred_check_branch
    %323 = sbr.rel (0) target = $region29
  $region28: #{tpu_custom_call.1} parent=0 // pred_region
    _
  $region29: #{tpu_custom_call.1} parent=0 // pred_fallthru
    _
  // Predicated region
  $region30: #{tpu_custom_call.1} parent=0 // pred_check
    _
  $region31: #{tpu_custom_call.1} parent=0 // pred_check_branch
    %325 = sbr.rel (0) target = $region33
  $region32: #{tpu_custom_call.1} parent=0 // pred_region
    _
  $region33: #{tpu_custom_call.1} parent=0 // pred_fallthru
    _

</llo_original>
